<compile_context>
chip_gen: v5e
topology: v5e:2x2
jax: 0.10.0
libtpu: 0.0.40
codegen_flags: <defaults>
</compile_context>

<pallas_src>
import jax
import jax.numpy as jnp
from jax.experimental import pallas as pl
from jax.experimental.pallas import tpu as pltpu


def _fused_gaussian_kernel(x_ref, w_ref, b_ref, mu_ref, lv_ref):
    """mu ++ logvar = x @ W_fused + b_fused, split and stored to two outputs.

    x_ref  : (bm, d_in)         batch tile
    w_ref  : (d_in, 2*d_out)    fused, pre-transposed weight (MXU-native K x N)
    b_ref  : (1, 2*d_out)       fused bias
    mu_ref : (bm, d_out)
    lv_ref : (bm, d_out)
    """
    d_out = mu_ref.shape[-1]
    y = jnp.dot(x_ref[...], w_ref[...], preferred_element_type=jnp.float32)
    y = (y + b_ref[...]).astype(mu_ref.dtype)      # (1, 2*d_out) broadcasts over rows
    mu_ref[...] = y[:, :d_out]
    lv_ref[...] = y[:, d_out:]


def _vmem_capacity_bytes():
    """Physical VMEM of the current chip; conservative v7x fallback."""
    try:
        return int(pltpu.get_tpu_info().vmem_capacity_bytes)
    except Exception:
        return 64 * 1024 * 1024


def fuse_gaussian_params(w_mu, b_mu, w_lv, b_lv):
    """One-time fusion of the two heads. Call OUTSIDE the hot path.

    Returns:
      w_fused: (d_in, 2*d_out)  — [W_mu ; W_lv] transposed to MXU-native (K, N)
      b_fused: (1, 2*d_out)
    """
    w_fused = jnp.concatenate([w_mu, w_lv], axis=0).T           # (d_in, 2*d_out)
    b_fused = jnp.concatenate([b_mu, b_lv]).reshape(1, -1)      # (1, 2*d_out)
    return w_fused, b_fused


def gaussian_layer_fused(x, w_fused, b_fused, *, block_m=512):
    """Hot-path forward. x: (B, d_in); w_fused: (d_in, 2*d_out); b_fused: (1, 2*d_out).

    Returns (mu, logvar), each (B, d_out).
    """
    B, d_in = x.shape
    n_out = w_fused.shape[1]
    d_out = n_out // 2
    itemsize = jnp.dtype(x.dtype).itemsize

    # --- generation-aware VMEM budget ---------------------------------------
    capacity = _vmem_capacity_bytes()            # 128 MiB v5e/v6e, 64 MiB v7x
    budget = (capacity * 3) // 4                 # headroom for vregs / internals

    resident = (w_fused.size + b_fused.size) * itemsize   # single-buffered W + b
    per_row = (d_in + n_out) * itemsize                   # one x row + one mu row + one lv row
    pipelined_per_row = 2 * per_row                       # x / mu / lv tiles are double-buffered
    if budget > resident:
        max_rows = max(8, ((budget - resident) // pipelined_per_row) // 8 * 8)
    else:
        max_rows = 8
    cap = min(block_m, max_rows)                          # multiple of 8

    bm = B if B <= cap else cap
    if B > 16:
        # Force >= 2 grid steps: both v7x TensorCores get work and DMA/compute
        # pipelining exists even when the whole batch would fit in one tile.
        half = ((-(-B // 2)) + 7) // 8 * 8                # round_up(ceil(B/2), 8)
        bm = min(bm, half)
    grid = (pl.cdiv(B, bm),)

    vmem_limit = int(min(capacity - (2 << 20),
                         max(budget, resident + 2 * pipelined_per_row * bm + (4 << 20))))

    cost = pl.CostEstimate(
        flops=2 * B * d_in * n_out,
        transcendentals=0,
        bytes_accessed=(x.size + w_fused.size + b_fused.size + B * n_out) * itemsize,
    )

    mu, logvar = pl.pallas_call(
        _fused_gaussian_kernel,
        out_shape=(jax.ShapeDtypeStruct((B, d_out), x.dtype),
                   jax.ShapeDtypeStruct((B, d_out), x.dtype)),
        grid=grid,
        in_specs=[
            pl.BlockSpec((bm, d_in), lambda i: (i, 0)),                # x: batch-tiled
            pl.BlockSpec((d_in, n_out), lambda i: (0, 0),
                         pipeline_mode=pl.Buffered(1)),                # W: resident, single-buffered
            pl.BlockSpec((1, n_out), lambda i: (0, 0),
                         pipeline_mode=pl.Buffered(1)),                # b: resident, single-buffered
        ],
        out_specs=(pl.BlockSpec((bm, d_out), lambda i: (i, 0)),
                   pl.BlockSpec((bm, d_out), lambda i: (i, 0))),
        compiler_params=pltpu.CompilerParams(
            dimension_semantics=("parallel",),        # megacore splits the batch axis
            vmem_limit_bytes=vmem_limit,
        ),
        cost_estimate=cost,
    )(x, w_fused, b_fused)
    return mu, logvar


def gaussian_layer(x, w_mu, b_mu, w_lv, b_lv, *, block_m=512):
    """Convenience wrapper with PyTorch-layout params (fuses per call).

    For repeated calls, call fuse_gaussian_params once and use
    gaussian_layer_fused directly (avoids a per-call HBM pass over the weights).
    """
    w_fused, b_fused = fuse_gaussian_params(w_mu, b_mu, w_lv, b_lv)
    return gaussian_layer_fused(x, w_fused, b_fused, block_m=block_m)


def init_linear_params(key, in_dim, out_dim):
    """Matches PyTorch nn.Linear default init: U[-1/sqrt(in), 1/sqrt(in)]."""
    kw, kb = jax.random.split(key)
    bound = 1.0 / jnp.sqrt(jnp.float32(in_dim))
    w = jax.random.uniform(kw, (out_dim, in_dim), jnp.float32, -bound, bound)
    b = jax.random.uniform(kb, (out_dim,), jnp.float32, -bound, bound)
    return w, b


if __name__ == "__main__":
    key = jax.random.PRNGKey(0)
    k_x, k_x2, k_mu, k_lv = jax.random.split(key, 4)

    input_dim = 32
    output_dim = 16
    w_mu, b_mu = init_linear_params(k_mu, input_dim, output_dim)
    w_lv, b_lv = init_linear_params(k_lv, input_dim, output_dim)
    w_fused, b_fused = fuse_gaussian_params(w_mu, b_mu, w_lv, b_lv)

    # Case 1: tiny batch (single grid step).
    x1 = jax.random.normal(k_x, (8, input_dim), jnp.float32)
    mu1, lv1 = gaussian_layer_fused(x1, w_fused, b_fused)
    jax.block_until_ready((mu1, lv1))
    assert mu1.shape == (8, output_dim) and lv1.shape == (8, output_dim)
    assert jnp.allclose(mu1, x1 @ w_mu.T + b_mu, atol=1e-5), "mu mismatch (B=8)"
    assert jnp.allclose(lv1, x1 @ w_lv.T + b_lv, atol=1e-5), "logvar mismatch (B=8)"

    # Case 2: B=40 -> forced 2 grid steps (24 + partial 16): exercises
    # multi-step pipelining and masked last-tile writes.
    x2 = jax.random.normal(k_x2, (40, input_dim), jnp.float32)
    mu2, lv2 = gaussian_layer_fused(x2, w_fused, b_fused)
    jax.block_until_ready((mu2, lv2))
    assert mu2.shape == (40, output_dim) and lv2.shape == (40, output_dim)
    assert jnp.allclose(mu2, x2 @ w_mu.T + b_mu, atol=1e-5), "mu mismatch (B=40)"
    assert jnp.allclose(lv2, x2 @ w_lv.T + b_lv, atol=1e-5), "logvar mismatch (B=40)"

    print("KERNEL_OK")
</pallas_src>

<mosaic_0001>
module attributes {stable_mosaic.version = 11 : i64} {
  func.func @_fused_gaussian_kernel(%arg0: i32, %arg1: memref<8x32xf32, #tpu.memory_space<vmem>>, %arg2: memref<32x32xf32, #tpu.memory_space<vmem>>, %arg3: memref<1x32xf32, #tpu.memory_space<vmem>>, %arg4: memref<8x16xf32, #tpu.memory_space<vmem>>, %arg5: memref<8x16xf32, #tpu.memory_space<vmem>>) attributes {dimension_semantics = [#tpu.dimension_semantics<parallel>], iteration_bounds = array<i64: 1>, scalar_prefetch = 0 : i64, scratch_operands = 0 : i64, tpu.core_type = #tpu.core_type<tc>, window_params = [{transform_indices = @transform_0, window_bounds = array<i64: 8, 32>}, {pipeline_mode = #tpu.pipeline_mode<synchronous>, transform_indices = @transform_1, window_bounds = array<i64: 32, 32>}, {pipeline_mode = #tpu.pipeline_mode<synchronous>, transform_indices = @transform_2, window_bounds = array<i64: 1, 32>}, {transform_indices = @transform_3, window_bounds = array<i64: 8, 16>}, {transform_indices = @transform_4, window_bounds = array<i64: 8, 16>}]} {
    %c0 = arith.constant 0 : index
    %c0_0 = arith.constant 0 : index
    %0 = vector.load %arg1[%c0, %c0_0] : memref<8x32xf32, #tpu.memory_space<vmem>>, vector<8x32xf32>
    %c0_1 = arith.constant 0 : index
    %c0_2 = arith.constant 0 : index
    %1 = vector.load %arg2[%c0_1, %c0_2] : memref<32x32xf32, #tpu.memory_space<vmem>>, vector<32x32xf32>
    %cst = arith.constant dense<0.000000e+00> : vector<8x32xf32>
    %2 = tpu.matmul %0, %1, %cst {dimension_numbers = #tpu.dot_dimension_numbers<[1], [0], [0], [1], [0, 0, 1, 1], [], []>} : vector<8x32xf32>, vector<32x32xf32>, vector<8x32xf32> -> vector<8x32xf32>
    %c0_3 = arith.constant 0 : index
    %c0_4 = arith.constant 0 : index
    %3 = vector.load %arg3[%c0_3, %c0_4] : memref<1x32xf32, #tpu.memory_space<vmem>>, vector<1x32xf32>
    %4 = vector.broadcast %3 : vector<1x32xf32> to vector<8x32xf32>
    %5 = arith.addf %2, %4 : vector<8x32xf32>
    %6 = vector.extract_strided_slice %5 {offsets = [0, 0], sizes = [8, 16], strides = [1, 1]} : vector<8x32xf32> to vector<8x16xf32>
    %c0_5 = arith.constant 0 : index
    %c0_6 = arith.constant 0 : index
    %7 = vector.load %arg4[%c0_5, %c0_6] : memref<8x16xf32, #tpu.memory_space<vmem>>, vector<8x16xf32>
    tpu.vector_store %arg4[%c0_5, %c0_6], %6 {strides = array<i32>} : memref<8x16xf32, #tpu.memory_space<vmem>>, vector<8x16xf32>,
    %8 = vector.extract_strided_slice %5 {offsets = [0, 16], sizes = [8, 16], strides = [1, 1]} : vector<8x32xf32> to vector<8x16xf32>
    %c0_7 = arith.constant 0 : index
    %c0_8 = arith.constant 0 : index
    %9 = vector.load %arg5[%c0_7, %c0_8] : memref<8x16xf32, #tpu.memory_space<vmem>>, vector<8x16xf32>
    tpu.vector_store %arg5[%c0_7, %c0_8], %8 {strides = array<i32>} : memref<8x16xf32, #tpu.memory_space<vmem>>, vector<8x16xf32>,
    return
  }
  func.func @transform_0(%arg0: i32) -> (i32, i32) {
    %c0_i32 = arith.constant 0 : i32
    %c0_i32_0 = arith.constant 0 : i32
    return %arg0, %c0_i32 : i32, i32
  }
  func.func @transform_1(%arg0: i32) -> (i32, i32) {
    %c0_i32 = arith.constant 0 : i32
    %c0_i32_0 = arith.constant 0 : i32
    %c0_i32_1 = arith.constant 0 : i32
    return %c0_i32, %c0_i32_0 : i32, i32
  }
  func.func @transform_2(%arg0: i32) -> (i32, i32) {
    %c0_i32 = arith.constant 0 : i32
    %c0_i32_0 = arith.constant 0 : i32
    %c0_i32_1 = arith.constant 0 : i32
    return %c0_i32, %c0_i32_0 : i32, i32
  }
  func.func @transform_3(%arg0: i32) -> (i32, i32) {
    %c0_i32 = arith.constant 0 : i32
    %c0_i32_0 = arith.constant 0 : i32
    return %arg0, %c0_i32 : i32, i32
  }
  func.func @transform_4(%arg0: i32) -> (i32, i32) {
    %c0_i32 = arith.constant 0 : i32
    %c0_i32_0 = arith.constant 0 : i32
    return %arg0, %c0_i32 : i32, i32
  }
}

</mosaic_0001>

<llo_original>
// kernel: tpu_custom_call.1
$region0: #{tpu_custom_call.1}
  #allocation0 [shape = 'u32[]', space=smem, size = 0x4, offset = 0x4, fixed_abs, tag = 'smem constant byte address 0x4 - core index']
  #allocation1 [shape = 'u32[72,128]{1,0:T(1,128)}', space=vmem, size = 0x9000, scoped, tag = 'internal scratch']
  %s0 = inlined_call_operand.hbm [shape: f32[8,32], index: 0, kind: input, shape index: {}]
  %s1 = inlined_call_operand.hbm [shape: f32[32,32], index: 1, kind: input, shape index: {}]
  %s2 = inlined_call_operand.vmem [shape: f32[1,32], index: 2, kind: input, shape index: {}]
  %s3 = inlined_call_operand.hbm [shape: f32[8,16], index: 3, kind: output, shape index: {0}]
  %s4 = inlined_call_operand.hbm [shape: f32[8,16], index: 4, kind: output, shape index: {1}]
  %5 = xla_tuple %s3, %s4
  %s6 = sld [smem:[#allocation0]]
  $region38: #{tpu_custom_call.1} parent=0
    _
  %s8 = ssub.s32 1, %s6
  %s9 = scalar_select 0, %s8, %s6
  $region1: #{tpu_custom_call.1} parent=0
    #allocation2 [shape = 'u8[4096]{0}', space=vmem, size = 0x1000, scoped, tag = 'input window, operand 0, single buffered']
    #allocation3 [shape = 's32[1]{0}', space=sflag, size = 0x4, scoped, tag = 'scoped memory for tpu_custom_call.1']
    #allocation4 [shape = 's32[1]{0}', space=sflag, size = 0x4, scoped, tag = 'scoped memory for tpu_custom_call.1']
    #allocation5 [shape = 'u8[16384]{0}', space=vmem, size = 0x4000, scoped, tag = 'input window, operand 1, single buffered']
    #allocation6 [shape = 's32[1]{0}', space=sflag, size = 0x4, scoped, tag = 'scoped memory for tpu_custom_call.1']
    #allocation7 [shape = 'u8[4096]{0}', space=vmem, size = 0x1000, scoped, tag = 'output window, operand 0, single buffered']
    #allocation8 [shape = 'u8[4096]{0}', space=vmem, size = 0x1000, scoped, tag = 'output window, operand 1, single buffered']
    #allocation9 [shape = 's32[1]{0}', space=sflag, size = 0x4, scoped, tag = 'scoped memory for tpu_custom_call.1']
    %10 = vsyncpa [#allocation3], 0
    %11 = vsyncpa [#allocation6], 0
    %12 = vsyncpa [#allocation4], 0
    %13 = vsyncpa [#allocation9], 0
    // Predicated region
    $region2: #{tpu_custom_call.1} parent=1 // pred_check
      _
    $region3: #{tpu_custom_call.1} parent=1 // pred_check_branch
      %15 = sbr.rel (0) target = $region5
    $region4: #{tpu_custom_call.1} parent=1 // pred_region
      %17 = vsyncadd [#allocation3], 0
      %s19 = sshll.u32 %s0, 4
      %s20 = int_to_ptr.hbm [resolvable:$true] %s19
      %s21 = sshll.u32 [#allocation2], 4
      %s22 = int_to_ptr.vmem [resolvable:$true] %s21
      %24 = dma.hbm_to_vmem [thread:$0]  %s20, 128, %s22, [#allocation3]
    $region5: #{tpu_custom_call.1} parent=1 // pred_fallthru
      _
    // Predicated region
    $region6: #{tpu_custom_call.1} parent=1 // pred_check
      _
    $region7: #{tpu_custom_call.1} parent=1 // pred_check_branch
      %26 = sbr.rel (0) target = $region9
    $region8: #{tpu_custom_call.1} parent=1 // pred_region
      %28 = vsyncadd [#allocation6], 0
      %s29 = sshll.u32 %s1, 4
      %s30 = int_to_ptr.hbm [resolvable:$true] %s29
      %s31 = sshll.u32 [#allocation5], 4
      %s32 = int_to_ptr.vmem [resolvable:$true] %s31
      %37 = dma.hbm_to_vmem [thread:$0]  %s30, 512, %s32, [#allocation6], 128, 128, 8
    $region9: #{tpu_custom_call.1} parent=1 // pred_fallthru
      _
    // Predicated region
    $region10: #{tpu_custom_call.1} parent=1 // pred_check
      _
    $region11: #{tpu_custom_call.1} parent=1 // pred_check_branch
      %39 = sbr.rel (0) target = $region13
    $region12: #{tpu_custom_call.1} parent=1 // pred_region
      _
    $region13: #{tpu_custom_call.1} parent=1 // pred_fallthru
      _
    // Predicated region
    $region14: #{tpu_custom_call.1} parent=1 // pred_check
      _
    $region15: #{tpu_custom_call.1} parent=1 // pred_check_branch
      %41 = sbr.rel (0) target = $region17
    $region16: #{tpu_custom_call.1} parent=1 // pred_region
      %43 = dma.done [#allocation3], 128
    $region17: #{tpu_custom_call.1} parent=1 // pred_fallthru
      _
    // Predicated region
    $region18: #{tpu_custom_call.1} parent=1 // pred_check
      _
    $region19: #{tpu_custom_call.1} parent=1 // pred_check_branch
      %45 = sbr.rel (0) target = $region21
    $region20: #{tpu_custom_call.1} parent=1 // pred_region
      %47 = dma.done [#allocation6], 512
    $region21: #{tpu_custom_call.1} parent=1 // pred_fallthru
      _
    %v48 = vld [vmem:[#allocation2] sm:$0xff]
    %v49 = vld [vmem:[#allocation5] sm:$0xff]
    %v50 = vld [vmem:[#allocation5 + $0x8] sm:$0xff]
    %v51 = vld [vmem:[#allocation5 + $0x10] sm:$0xff]
    %v52 = vld [vmem:[#allocation5 + $0x18] sm:$0xff]
    %v53 = vld [vmem:[%s2] sm:$0x1]
    %v55 = vperm.slane %v53, 0
    %vm57 = vcmask 261120
    %v59 = vsel %vm57, %v48, 0
    %61 = vmatpush.msra.mxu0 0.0
    %62 = vmatpush.msra.mxu0 0.0
    %63 = vmatpush.msra.mxu0 0.0
    %64 = vmatpush.msra.mxu0 0.0
    %65 = vmatpush.msra.mxu0 0.0
    %66 = vmatpush.msra.mxu0 0.0
    %67 = vmatpush.msra.mxu0 0.0
    %68 = vmatpush.msra.mxu0 0.0
    %69 = vmatpush.msra.mxu0 0.0
    %70 = vmatpush.msra.mxu0 0.0
    %71 = vmatpush.msra.mxu0 0.0
    %72 = vmatpush.msra.mxu0 0.0
    %73 = vmatpush.msra.mxu0 %v52
    %74 = vmatpush.msra.mxu0 %v51
    %75 = vmatpush.msra.mxu0 %v50
    %76 = vmatpush.msra.mxu0 %v49
    %77 = vmatmul.f32.gmra.mxu0 %v59
    %v78 = vpop.f32.mrf.mxu0
    %v79 = vadd.f32 %v55, %v78
    %80 = vdwg.mxu0
    %vm81 = vcmask 130048
    %82 = vst.msk [vmem:[#allocation7] sm:$0xff] %vm81, %v79
    %84 = vrot.lane.b32.xlu0 %v79, 112
    %v85 = vpop.permute.xlu0 %84
    %87 = vst.msk [vmem:[#allocation8] sm:$0xff] %vm81, %v85
    // Predicated region
    $region22: #{tpu_custom_call.1} parent=1 // pred_check
      _
    $region23: #{tpu_custom_call.1} parent=1 // pred_check_branch
      %89 = sbr.rel (0) target = $region25
    $region24: #{tpu_custom_call.1} parent=1 // pred_region
      %91 = vsyncadd [#allocation4], 0
      %s93 = sshll.u32 [#allocation7], 4
      %s94 = int_to_ptr.vmem [resolvable:$true] %s93
      %s95 = sshll.u32 %s3, 4
      %s96 = int_to_ptr.hbm [resolvable:$true] %s95
      %98 = dma.vmem_to_hbm [thread:$0]  %s94, 128, %s96, [#allocation4]
    $region25: #{tpu_custom_call.1} parent=1 // pred_fallthru
      _
    // Predicated region
    $region26: #{tpu_custom_call.1} parent=1 // pred_check
      _
    $region27: #{tpu_custom_call.1} parent=1 // pred_check_branch
      %100 = sbr.rel (0) target = $region29
    $region28: #{tpu_custom_call.1} parent=1 // pred_region
      %102 = vsyncadd [#allocation9], 0
      %s104 = sshll.u32 [#allocation8], 4
      %s105 = int_to_ptr.vmem [resolvable:$true] %s104
      %s106 = sshll.u32 %s4, 4
      %s107 = int_to_ptr.hbm [resolvable:$true] %s106
      %109 = dma.vmem_to_hbm [thread:$0]  %s105, 128, %s107, [#allocation9]
    $region29: #{tpu_custom_call.1} parent=1 // pred_fallthru
      _
    // Predicated region
    $region30: #{tpu_custom_call.1} parent=1 // pred_check
      _
    $region31: #{tpu_custom_call.1} parent=1 // pred_check_branch
      %111 = sbr.rel (0) target = $region33
    $region32: #{tpu_custom_call.1} parent=1 // pred_region
      %113 = dma.done [#allocation4], 128
    $region33: #{tpu_custom_call.1} parent=1 // pred_fallthru
      _
    // Predicated region
    $region34: #{tpu_custom_call.1} parent=1 // pred_check
      _
    $region35: #{tpu_custom_call.1} parent=1 // pred_check_branch
      %115 = sbr.rel (0) target = $region37
    $region36: #{tpu_custom_call.1} parent=1 // pred_region
      %117 = dma.done [#allocation9], 128
    $region37: #{tpu_custom_call.1} parent=1 // pred_fallthru
      _
    %118 = vsyncpa [#allocation3], 1
    %119 = vsyncpa [#allocation6], 1
    %120 = vsyncpa [#allocation4], 1
    %121 = vsyncpa [#allocation9], 1

</llo_original>
